<compile_context>
chip_gen: v7x
topology: tpu7x:2x2x1
jax: 0.10.0
libtpu: 0.0.40
codegen_flags: <defaults>
</compile_context>

<pallas_src>
import jax
import jax.numpy as jnp
from jax.experimental import pallas as pl
from jax.experimental.pallas import tpu as pltpu

LANE = 128


def _round_up(x, m):
    return (x + m - 1) // m * m


def _sigmoid_f32(h):
    # EUP-friendly sigmoid: tanh goes to the EUP slot; identical math to 1/(1+e^-h).
    return 0.5 * jnp.tanh(0.5 * h) + 0.5


def _tpu_vmem_and_cores():
    """(per-TensorCore VMEM bytes, TensorCores sharing the grid) -- defensive."""
    vmem = None
    try:
        vmem = int(getattr(pltpu.get_tpu_info(), "vmem_capacity_bytes", 0)) or None
    except Exception:
        vmem = None
    try:
        kind = jax.devices()[0].device_kind.lower()
    except Exception:
        kind = ""
    if vmem is None:
        vmem = (128 << 20) if ("v5" in kind or "v6" in kind) else (64 << 20)
    num_tc = 2 if "7" in kind else 1  # v7x: two TensorCores per chip
    return vmem, num_tc


# ---------------------------------------------------------------------------
# Fused path: both Linear+Sigmoid layers in one grid step (weights resident).
# ---------------------------------------------------------------------------
def _dae_fused_kernel(x_ref, wet_ref, be_ref, wdt_ref, bd_ref, enc_ref, rec_ref):
    """x:(TB,in_f_p)  wet:(in_f_p,out_f_p)  wdt:(out_f_p,in_f_p)  biases:(1,·)."""
    x = x_ref[...]  # native dtype straight into the MXU, f32 accumulation

    # encoder: X @ W_enc^T  (pre-transposed in the wrapper -> plain [M,K]@[K,N])
    h = jnp.dot(x, wet_ref[...], preferred_element_type=jnp.float32)
    h = h + be_ref[...].astype(jnp.float32)
    enc = _sigmoid_f32(h)

    # One low-precision copy: stored to the output *and* fed to the decoder MXU.
    enc_lo = enc.astype(enc_ref.dtype)
    enc_ref[...] = enc_lo

    # decoder: enc @ W_dec^T
    r = jnp.dot(enc_lo, wdt_ref[...], preferred_element_type=jnp.float32)
    r = r + bd_ref[...].astype(jnp.float32)
    rec_ref[...] = _sigmoid_f32(r).astype(rec_ref.dtype)


def _pick_tile_batch(n, in_f_p, out_f_p, itemsize, sublane, budget_bytes, num_tc):
    """Largest batch tile fitting the VMEM budget; None => weights don't fit."""
    # double-buffered x tile + double-buffered enc/rec output tiles + f32 temps
    per_row = (2 * in_f_p + 2 * out_f_p + 2 * in_f_p) * itemsize \
              + (in_f_p + out_f_p) * 4
    # single-buffered (pl.Buffered(1)) weights + biases, resident across the grid
    weight_bytes = (2 * in_f_p * out_f_p + in_f_p + out_f_p) * itemsize
    avail = budget_bytes - weight_bytes
    if avail < sublane * per_row:
        return None  # resident weights leave no room -> use the K-tiled path
    tile = min(avail // per_row, 1024, _round_up(n, sublane))
    if num_tc > 1 and n > 2 * num_tc * sublane:
        # target grid >= 2*num_tc so each TensorCore still gets >= 2 pipelined steps
        tile = min(tile, _round_up(pl.cdiv(n, 2 * num_tc), sublane))
    return max(sublane, int(tile) // sublane * sublane)


# ---------------------------------------------------------------------------
# Fallback path: K-tiled Linear+Sigmoid with an f32 VMEM accumulator.
# ---------------------------------------------------------------------------
def _linear_sigmoid_kernel(x_ref, w_ref, b_ref, o_ref, acc_ref):
    @pl.when(pl.program_id(2) == 0)
    def _():
        acc_ref[...] = jnp.zeros_like(acc_ref)

    acc_ref[...] += jnp.dot(x_ref[...], w_ref[...],
                            preferred_element_type=jnp.float32)

    @pl.when(pl.program_id(2) == pl.num_programs(2) - 1)
    def _():
        h = acc_ref[...] + b_ref[...].astype(jnp.float32)
        o_ref[...] = _sigmoid_f32(h).astype(o_ref.dtype)


def _divisor_tile(total, cap):
    """Largest multiple of LANE that divides `total` (itself a LANE multiple), <= cap."""
    t = max(LANE, (min(total, cap) // LANE) * LANE)
    while total % t:
        t -= LANE
    return t


def _linear_sigmoid(x_p, w_t_p, b_p, *, tile_m, feature_tile, out_dtype, vmem_limit):
    n, k_p = x_p.shape
    _, n_p = w_t_p.shape
    tile_k = _divisor_tile(k_p, feature_tile)  # K tiles must divide k_p exactly
    tile_n = _divisor_tile(n_p, feature_tile)
    grid = (pl.cdiv(n, tile_m), n_p // tile_n, k_p // tile_k)
    return pl.pallas_call(
        _linear_sigmoid_kernel,
        out_shape=jax.ShapeDtypeStruct((n, n_p), out_dtype),
        grid_spec=pltpu.PrefetchScalarGridSpec(
            num_scalar_prefetch=0,
            grid=grid,
            in_specs=[
                pl.BlockSpec((tile_m, tile_k), lambda i, j, k: (i, k)),
                pl.BlockSpec((tile_k, tile_n), lambda i, j, k: (k, j)),
                pl.BlockSpec((1, tile_n), lambda i, j, k: (0, j)),
            ],
            out_specs=pl.BlockSpec((tile_m, tile_n), lambda i, j, k: (i, j)),
            scratch_shapes=[pltpu.VMEM((tile_m, tile_n), jnp.float32)],
        ),
        compiler_params=pltpu.CompilerParams(
            dimension_semantics=("parallel", "parallel", "arbitrary"),
            vmem_limit_bytes=vmem_limit,
        ),
    )(x_p, w_t_p, b_p)


# ---------------------------------------------------------------------------
# Public wrapper.
# ---------------------------------------------------------------------------
def dae_pretrain_forward(x, w_enc, b_enc, w_dec, b_dec, *,
                         tile_batch=None, force_unfused=False,
                         unfused_feature_tile=512):
    """DAE_pretrain.forward -> (encoded, recon).

    x     : (N, in_features)
    w_enc : (out_features, in_features)   -- PyTorch nn.Linear layout
    b_enc : (out_features,)
    w_dec : (in_features, out_features)   -- PyTorch nn.Linear layout
    b_dec : (in_features,)
    """
    n, in_f = x.shape
    out_f, in_f_w = w_enc.shape
    assert in_f_w == in_f and w_dec.shape == (in_f, out_f)

    dtype = x.dtype
    itemsize = jnp.dtype(dtype).itemsize
    sublane = 8 if itemsize >= 4 else 32 // itemsize  # 8 f32 / 16 bf16 / 32 int8

    vmem_cap, num_tc = _tpu_vmem_and_cores()
    budget = int(vmem_cap * 0.8)  # one number feeds both tile picker and compiler

    # Lane-dense feature dims (zero padding keeps the math exact).
    in_f_p = _round_up(in_f, LANE)
    out_f_p = _round_up(out_f, LANE)

    def padr(a, rows):
        return a if a.shape[0] == rows else jnp.pad(a, ((0, rows - a.shape[0]), (0, 0)))

    def padc(a, cols):
        return a if a.shape[1] == cols else jnp.pad(a, ((0, 0), (0, cols - a.shape[1])))

    # Zero-pad only the feature dims; the batch axis stays ragged (cdiv grid).
    x_p = padc(x, in_f_p)
    # One-time transposes so both matmuls are plain [M,K]@[K,N] (no in-kernel vxpose).
    wet_p = padc(padr(w_enc.T, in_f_p), out_f_p)   # (in_f_p, out_f_p)
    wdt_p = padc(padr(w_dec.T, out_f_p), in_f_p)   # (out_f_p, in_f_p)
    be_p = padc(b_enc.reshape(1, out_f), out_f_p)
    bd_p = padc(b_dec.reshape(1, in_f), in_f_p)

    if tile_batch is None:
        tile_batch = _pick_tile_batch(n, in_f_p, out_f_p, itemsize, sublane,
                                      budget, num_tc)
    else:
        tile_batch = max(sublane, _round_up(int(tile_batch), sublane))

    if force_unfused or tile_batch is None:
        # Resident full-width weights would not fit (or forced): two K-tiled
        # linear+sigmoid kernels with an f32 accumulator, reduction axis last.
        tile_m = min(_round_up(n, sublane), 256)
        enc_p = _linear_sigmoid(x_p, wet_p, be_p, tile_m=tile_m,
                                feature_tile=unfused_feature_tile,
                                out_dtype=dtype, vmem_limit=budget)
        rec_p = _linear_sigmoid(enc_p, wdt_p, bd_p, tile_m=tile_m,
                                feature_tile=unfused_feature_tile,
                                out_dtype=dtype, vmem_limit=budget)
    else:
        grid = (pl.cdiv(n, tile_batch),)
        # Grid-invariant operands: single-buffer them (halves their VMEM footprint).
        const = dict(index_map=lambda i: (0, 0), pipeline_mode=pl.Buffered(1))
        enc_p, rec_p = pl.pallas_call(
            _dae_fused_kernel,
            out_shape=(
                jax.ShapeDtypeStruct((n, out_f_p), dtype),
                jax.ShapeDtypeStruct((n, in_f_p), dtype),
            ),
            grid_spec=pltpu.PrefetchScalarGridSpec(
                num_scalar_prefetch=0,
                grid=grid,
                in_specs=[
                    pl.BlockSpec((tile_batch, in_f_p), lambda i: (i, 0)),
                    pl.BlockSpec((in_f_p, out_f_p), **const),
                    pl.BlockSpec((1, out_f_p), **const),
                    pl.BlockSpec((out_f_p, in_f_p), **const),
                    pl.BlockSpec((1, in_f_p), **const),
                ],
                out_specs=[
                    pl.BlockSpec((tile_batch, out_f_p), lambda i: (i, 0)),
                    pl.BlockSpec((tile_batch, in_f_p), lambda i: (i, 0)),
                ],
            ),
            compiler_params=pltpu.CompilerParams(
                dimension_semantics=("parallel",),
                vmem_limit_bytes=budget,
            ),
        )(x_p, wet_p, be_p, wdt_p, bd_p)

    encoded = enc_p[:, :out_f]
    recon = rec_p[:, :in_f]
    return encoded, recon


def _init_linear(key, out_features, in_features):
    """Deterministic PyTorch-style uniform(-1/sqrt(in), 1/sqrt(in)) init."""
    kw, kb = jax.random.split(key)
    bound = 1.0 / jnp.sqrt(jnp.float32(in_features))
    w = jax.random.uniform(kw, (out_features, in_features), jnp.float32,
                           minval=-bound, maxval=bound)
    b = jax.random.uniform(kb, (out_features,), jnp.float32,
                           minval=-bound, maxval=bound)
    return w, b


def _reference_forward(x, w_enc, b_enc, w_dec, b_dec):
    enc = jax.nn.sigmoid(x @ w_enc.T + b_enc)
    rec = jax.nn.sigmoid(enc @ w_dec.T + b_dec)
    return enc, rec


if __name__ == "__main__":
    key = jax.random.PRNGKey(0)

    cases = [
        # (batch, in_features, out_features, kwargs)
        (8, 16, 32, {}),                        # module demo shapes
        (48, 100, 72, {}),                      # non-128-aligned features
        (50, 100, 72, {"tile_batch": 16}),      # multi-step grid + ragged last block
        (40, 300, 200, {"force_unfused": True,  # K-tiled f32-accumulator path
                        "unfused_feature_tile": 128}),
    ]
    for batch, in_features, out_features, kwargs in cases:
        kx, ke, kd, key = jax.random.split(key, 4)
        x = jax.random.normal(kx, (batch, in_features), jnp.float32)
        w_enc, b_enc = _init_linear(ke, out_features, in_features)
        w_dec, b_dec = _init_linear(kd, in_features, out_features)

        encoded, recon = dae_pretrain_forward(x, w_enc, b_enc, w_dec, b_dec, **kwargs)
        jax.block_until_ready((encoded, recon))

        enc_ref, rec_ref = _reference_forward(x, w_enc, b_enc, w_dec, b_dec)
        assert encoded.shape == (batch, out_features)
        assert recon.shape == (batch, in_features)
        assert jnp.allclose(encoded, enc_ref, atol=1e-5, rtol=1e-5), "encoded mismatch"
        assert jnp.allclose(recon, rec_ref, atol=1e-5, rtol=1e-5), "recon mismatch"

    print("KERNEL_OK")
</pallas_src>

<mosaic_0001>
module attributes {stable_mosaic.version = 11 : i64} {
  func.func @_dae_fused_kernel(%arg0: i32, %arg1: memref<8x128xf32, #tpu.memory_space<vmem>>, %arg2: memref<128x128xf32, #tpu.memory_space<vmem>>, %arg3: memref<1x128xf32, #tpu.memory_space<vmem>>, %arg4: memref<128x128xf32, #tpu.memory_space<vmem>>, %arg5: memref<1x128xf32, #tpu.memory_space<vmem>>, %arg6: memref<8x128xf32, #tpu.memory_space<vmem>>, %arg7: memref<8x128xf32, #tpu.memory_space<vmem>>) attributes {dimension_semantics = [#tpu.dimension_semantics<parallel>], iteration_bounds = array<i64: 1>, scalar_prefetch = 0 : i64, scratch_operands = 0 : i64, tpu.core_type = #tpu.core_type<tc>, window_params = [{transform_indices = @transform_0, window_bounds = array<i64: 8, 128>}, {pipeline_mode = #tpu.pipeline_mode<synchronous>, transform_indices = @transform_1, window_bounds = array<i64: 128, 128>}, {pipeline_mode = #tpu.pipeline_mode<synchronous>, transform_indices = @transform_2, window_bounds = array<i64: 1, 128>}, {pipeline_mode = #tpu.pipeline_mode<synchronous>, transform_indices = @transform_3, window_bounds = array<i64: 128, 128>}, {pipeline_mode = #tpu.pipeline_mode<synchronous>, transform_indices = @transform_4, window_bounds = array<i64: 1, 128>}, {transform_indices = @transform_5, window_bounds = array<i64: 8, 128>}, {transform_indices = @transform_6, window_bounds = array<i64: 8, 128>}]} {
    %c0 = arith.constant 0 : index
    %c0_0 = arith.constant 0 : index
    %0 = vector.load %arg1[%c0, %c0_0] : memref<8x128xf32, #tpu.memory_space<vmem>>, vector<8x128xf32>
    %c0_1 = arith.constant 0 : index
    %c0_2 = arith.constant 0 : index
    %1 = vector.load %arg2[%c0_1, %c0_2] : memref<128x128xf32, #tpu.memory_space<vmem>>, vector<128x128xf32>
    %cst = arith.constant dense<0.000000e+00> : vector<8x128xf32>
    %2 = tpu.matmul %0, %1, %cst {dimension_numbers = #tpu.dot_dimension_numbers<[1], [0], [0], [1], [0, 0, 1, 1], [], []>} : vector<8x128xf32>, vector<128x128xf32>, vector<8x128xf32> -> vector<8x128xf32>
    %c0_3 = arith.constant 0 : index
    %c0_4 = arith.constant 0 : index
    %3 = vector.load %arg3[%c0_3, %c0_4] : memref<1x128xf32, #tpu.memory_space<vmem>>, vector<1x128xf32>
    %4 = vector.broadcast %3 : vector<1x128xf32> to vector<8x128xf32>
    %5 = arith.addf %2, %4 : vector<8x128xf32>
    %cst_5 = arith.constant 5.000000e-01 : f32
    %6 = vector.broadcast %cst_5 : f32 to vector<8x128xf32>
    %7 = arith.mulf %6, %5 : vector<8x128xf32>
    %8 = math.tanh %7 : vector<8x128xf32>
    %cst_6 = arith.constant 5.000000e-01 : f32
    %9 = vector.broadcast %cst_6 : f32 to vector<8x128xf32>
    %10 = arith.mulf %9, %8 : vector<8x128xf32>
    %cst_7 = arith.constant 5.000000e-01 : f32
    %11 = vector.broadcast %cst_7 : f32 to vector<8x128xf32>
    %12 = arith.addf %10, %11 : vector<8x128xf32>
    %c0_8 = arith.constant 0 : index
    %c0_9 = arith.constant 0 : index
    %13 = vector.load %arg6[%c0_8, %c0_9] : memref<8x128xf32, #tpu.memory_space<vmem>>, vector<8x128xf32>
    tpu.vector_store %arg6[%c0_8, %c0_9], %12 {strides = array<i32>} : memref<8x128xf32, #tpu.memory_space<vmem>>, vector<8x128xf32>,
    %c0_10 = arith.constant 0 : index
    %c0_11 = arith.constant 0 : index
    %14 = vector.load %arg4[%c0_10, %c0_11] : memref<128x128xf32, #tpu.memory_space<vmem>>, vector<128x128xf32>
    %cst_12 = arith.constant dense<0.000000e+00> : vector<8x128xf32>
    %15 = tpu.matmul %12, %14, %cst_12 {dimension_numbers = #tpu.dot_dimension_numbers<[1], [0], [0], [1], [0, 0, 1, 1], [], []>} : vector<8x128xf32>, vector<128x128xf32>, vector<8x128xf32> -> vector<8x128xf32>
    %c0_13 = arith.constant 0 : index
    %c0_14 = arith.constant 0 : index
    %16 = vector.load %arg5[%c0_13, %c0_14] : memref<1x128xf32, #tpu.memory_space<vmem>>, vector<1x128xf32>
    %17 = vector.broadcast %16 : vector<1x128xf32> to vector<8x128xf32>
    %18 = arith.addf %15, %17 : vector<8x128xf32>
    %cst_15 = arith.constant 5.000000e-01 : f32
    %19 = vector.broadcast %cst_15 : f32 to vector<8x128xf32>
    %20 = arith.mulf %19, %18 : vector<8x128xf32>
    %21 = math.tanh %20 : vector<8x128xf32>
    %cst_16 = arith.constant 5.000000e-01 : f32
    %22 = vector.broadcast %cst_16 : f32 to vector<8x128xf32>
    %23 = arith.mulf %22, %21 : vector<8x128xf32>
    %cst_17 = arith.constant 5.000000e-01 : f32
    %24 = vector.broadcast %cst_17 : f32 to vector<8x128xf32>
    %25 = arith.addf %23, %24 : vector<8x128xf32>
    %c0_18 = arith.constant 0 : index
    %c0_19 = arith.constant 0 : index
    %26 = vector.load %arg7[%c0_18, %c0_19] : memref<8x128xf32, #tpu.memory_space<vmem>>, vector<8x128xf32>
    tpu.vector_store %arg7[%c0_18, %c0_19], %25 {strides = array<i32>} : memref<8x128xf32, #tpu.memory_space<vmem>>, vector<8x128xf32>,
    return
  }
  func.func @transform_0(%arg0: i32) -> (i32, i32) {
    %c0_i32 = arith.constant 0 : i32
    %c0_i32_0 = arith.constant 0 : i32
    return %arg0, %c0_i32 : i32, i32
  }
  func.func @transform_1(%arg0: i32) -> (i32, i32) {
    %c0_i32 = arith.constant 0 : i32
    %c0_i32_0 = arith.constant 0 : i32
    %c0_i32_1 = arith.constant 0 : i32
    return %c0_i32, %c0_i32_0 : i32, i32
  }
  func.func @transform_2(%arg0: i32) -> (i32, i32) {
    %c0_i32 = arith.constant 0 : i32
    %c0_i32_0 = arith.constant 0 : i32
    %c0_i32_1 = arith.constant 0 : i32
    return %c0_i32, %c0_i32_0 : i32, i32
  }
  func.func @transform_3(%arg0: i32) -> (i32, i32) {
    %c0_i32 = arith.constant 0 : i32
    %c0_i32_0 = arith.constant 0 : i32
    %c0_i32_1 = arith.constant 0 : i32
    return %c0_i32, %c0_i32_0 : i32, i32
  }
  func.func @transform_4(%arg0: i32) -> (i32, i32) {
    %c0_i32 = arith.constant 0 : i32
    %c0_i32_0 = arith.constant 0 : i32
    %c0_i32_1 = arith.constant 0 : i32
    return %c0_i32, %c0_i32_0 : i32, i32
  }
  func.func @transform_5(%arg0: i32) -> (i32, i32) {
    %c0_i32 = arith.constant 0 : i32
    %c0_i32_0 = arith.constant 0 : i32
    return %arg0, %c0_i32 : i32, i32
  }
  func.func @transform_6(%arg0: i32) -> (i32, i32) {
    %c0_i32 = arith.constant 0 : i32
    %c0_i32_0 = arith.constant 0 : i32
    return %arg0, %c0_i32 : i32, i32
  }
}

</mosaic_0001>

<llo_original>
// kernel: tpu_custom_call.1
$region0: #{tpu_custom_call.1}
  #allocation0 [shape = 'u32[]', space=smem, size = 0x4, offset = 0x4, fixed_abs, tag = 'smem constant byte address 0x4 - core index']
  #allocation1 [shape = 'u32[144,128]{1,0:T(1,128)}', space=vmem, size = 0x12000, scoped, tag = 'internal scratch']
  %s0 = inlined_call_operand.hbm [shape: f32[8,128], index: 0, kind: input, shape index: {}]
  %s1 = inlined_call_operand.hbm [shape: f32[128,128], index: 1, kind: input, shape index: {}]
  %s2 = inlined_call_operand.vmem [shape: f32[1,128], index: 2, kind: input, shape index: {}]
  %s3 = inlined_call_operand.hbm [shape: f32[128,128], index: 3, kind: input, shape index: {}]
  %s4 = inlined_call_operand.vmem [shape: f32[1,128], index: 4, kind: input, shape index: {}]
  %s5 = inlined_call_operand.hbm [shape: f32[8,128], index: 5, kind: output, shape index: {0}]
  %s6 = inlined_call_operand.hbm [shape: f32[8,128], index: 6, kind: output, shape index: {1}]
  %7 = xla_tuple %s5, %s6
  %s8 = sld [smem:[#allocation0]]
  $region50: #{tpu_custom_call.1} parent=0
    _
  %s10 = ssub.s32 1, %s8
  %s11 = scalar_select 0, %s10, %s8
  $region1: #{tpu_custom_call.1} parent=0
    #allocation2 [shape = 'u8[4096]{0}', space=vmem, size = 0x1000, scoped, tag = 'input window, operand 0, single buffered']
    #allocation3 [shape = 's32[1]{0}', space=sflag, size = 0x4, scoped, tag = 'scoped memory for tpu_custom_call.1']
    #allocation4 [shape = 's32[1]{0}', space=sflag, size = 0x4, scoped, tag = 'scoped memory for tpu_custom_call.1']
    #allocation5 [shape = 'u8[65536]{0}', space=vmem, size = 0x10000, scoped, tag = 'input window, operand 1, single buffered']
    #allocation6 [shape = 's32[1]{0}', space=sflag, size = 0x4, scoped, tag = 'scoped memory for tpu_custom_call.1']
    #allocation7 [shape = 'u8[65536]{0}', space=vmem, size = 0x10000, scoped, tag = 'input window, operand 3, single buffered']
    #allocation8 [shape = 'u8[4096]{0}', space=vmem, size = 0x1000, scoped, tag = 'output window, operand 0, single buffered']
    #allocation9 [shape = 'u8[4096]{0}', space=vmem, size = 0x1000, scoped, tag = 'output window, operand 1, single buffered']
    #allocation10 [shape = 's32[1]{0}', space=sflag, size = 0x4, scoped, tag = 'scoped memory for tpu_custom_call.1']
    %12 = vsyncpa [#allocation3], 0
    %13 = vsyncpa [#allocation6], 0
    %14 = vsyncpa [#allocation4], 0
    %15 = vsyncpa [#allocation10], 0
    // Predicated region
    $region2: #{tpu_custom_call.1} parent=1 // pred_check
      _
    $region3: #{tpu_custom_call.1} parent=1 // pred_check_branch
      %17 = sbr.rel (0) target = $region5
    $region4: #{tpu_custom_call.1} parent=1 // pred_region
      %s19 = ssub.s32 128, 128
      %20 = vsyncadd [#allocation3], %s19
      %s22 = sshll.u32 [#allocation2], 4
      %s23 = int_to_ptr.vmem [resolvable:$true] %s22
      %25 = dma.hbm_to_vmem [thread:$0]  %s0, 128, %s23, [#allocation3]
    $region5: #{tpu_custom_call.1} parent=1 // pred_fallthru
      _
    // Predicated region
    $region6: #{tpu_custom_call.1} parent=1 // pred_check
      _
    $region7: #{tpu_custom_call.1} parent=1 // pred_check_branch
      %27 = sbr.rel (0) target = $region9
    $region8: #{tpu_custom_call.1} parent=1 // pred_region
      %s29 = ssub.s32 2048, 2048
      %30 = vsyncadd [#allocation6], %s29
      %s31 = sshll.u32 [#allocation5], 4
      %s32 = int_to_ptr.vmem [resolvable:$true] %s31
      %37 = dma.hbm_to_vmem [thread:$0]  %s1, 2048, %s32, [#allocation6], 128, 128, 8
    $region9: #{tpu_custom_call.1} parent=1 // pred_fallthru
      _
    // Predicated region
    $region10: #{tpu_custom_call.1} parent=1 // pred_check
      _
    $region11: #{tpu_custom_call.1} parent=1 // pred_check_branch
      %39 = sbr.rel (0) target = $region13
    $region12: #{tpu_custom_call.1} parent=1 // pred_region
      _
    $region13: #{tpu_custom_call.1} parent=1 // pred_fallthru
      _
    // Predicated region
    $region14: #{tpu_custom_call.1} parent=1 // pred_check
      _
    $region15: #{tpu_custom_call.1} parent=1 // pred_check_branch
      %41 = sbr.rel (0) target = $region17
    $region16: #{tpu_custom_call.1} parent=1 // pred_region
      %s43 = ssub.s32 2048, 2048
      %44 = vsyncadd [#allocation6], %s43
      %s45 = sshll.u32 [#allocation7], 4
      %s46 = int_to_ptr.vmem [resolvable:$true] %s45
      %51 = dma.hbm_to_vmem [thread:$0]  %s3, 2048, %s46, [#allocation6], 128, 128, 8
    $region17: #{tpu_custom_call.1} parent=1 // pred_fallthru
      _
    // Predicated region
    $region18: #{tpu_custom_call.1} parent=1 // pred_check
      _
    $region19: #{tpu_custom_call.1} parent=1 // pred_check_branch
      %53 = sbr.rel (0) target = $region21
    $region20: #{tpu_custom_call.1} parent=1 // pred_region
      _
    $region21: #{tpu_custom_call.1} parent=1 // pred_fallthru
      _
    // Predicated region
    $region22: #{tpu_custom_call.1} parent=1 // pred_check
      _
    $region23: #{tpu_custom_call.1} parent=1 // pred_check_branch
      %55 = sbr.rel (0) target = $region25
    $region24: #{tpu_custom_call.1} parent=1 // pred_region
      %56 = dma.done [#allocation3], 128
    $region25: #{tpu_custom_call.1} parent=1 // pred_fallthru
      _
    // Predicated region
    $region26: #{tpu_custom_call.1} parent=1 // pred_check
      _
    $region27: #{tpu_custom_call.1} parent=1 // pred_check_branch
      %58 = sbr.rel (0) target = $region29
    $region28: #{tpu_custom_call.1} parent=1 // pred_region
      %59 = dma.done [#allocation6], 2048
    $region29: #{tpu_custom_call.1} parent=1 // pred_fallthru
      _
    // Predicated region
    $region30: #{tpu_custom_call.1} parent=1 // pred_check
      _
    $region31: #{tpu_custom_call.1} parent=1 // pred_check_branch
      %61 = sbr.rel (0) target = $region33
    $region32: #{tpu_custom_call.1} parent=1 // pred_region
      %62 = dma.done [#allocation6], 2048
    $region33: #{tpu_custom_call.1} parent=1 // pred_fallthru
      _
    %v63 = vld [vmem:[#allocation2] sm:$0xff]
    %v64 = vld [vmem:[#allocation5] sm:$0xff]
    %v65 = vld [vmem:[#allocation5 + $0x8] sm:$0xff]
    %v66 = vld [vmem:[#allocation5 + $0x10] sm:$0xff]
    %v67 = vld [vmem:[#allocation5 + $0x18] sm:$0xff]
    %v68 = vld [vmem:[#allocation5 + $0x20] sm:$0xff]
    %v69 = vld [vmem:[#allocation5 + $0x28] sm:$0xff]
    %v70 = vld [vmem:[#allocation5 + $0x30] sm:$0xff]
    %v71 = vld [vmem:[#allocation5 + $0x38] sm:$0xff]
    %v72 = vld [vmem:[#allocation5 + $0x40] sm:$0xff]
    %v73 = vld [vmem:[#allocation5 + $0x48] sm:$0xff]
    %v74 = vld [vmem:[#allocation5 + $0x50] sm:$0xff]
    %v75 = vld [vmem:[#allocation5 + $0x58] sm:$0xff]
    %v76 = vld [vmem:[#allocation5 + $0x60] sm:$0xff]
    %v77 = vld [vmem:[#allocation5 + $0x68] sm:$0xff]
    %v78 = vld [vmem:[#allocation5 + $0x70] sm:$0xff]
    %v79 = vld [vmem:[#allocation5 + $0x78] sm:$0xff]
    %v80 = vld [vmem:[%s2] sm:$0x1]
    %v82 = vlaneseq
    %v83 = vshrl.u32 %v82, 7
    %v84 = vsub.s32 0, %v83
    %v85 = vrot.slane %v80, %v84
    %87 = vmatprep.subr.mxu0 0.0
    %88 = vmatpush1.msra.mxu0 %v64
    %89 = vmatprep.subr.mxu0 0.0
    %90 = vmatpush1.msra.mxu0 %v65
    %91 = vmatprep.subr.mxu0 0.0
    %92 = vmatpush1.msra.mxu0 %v66
    %93 = vmatprep.subr.mxu0 0.0
    %94 = vmatpush1.msra.mxu0 %v67
    %95 = vmatprep.subr.mxu0 0.0
    %96 = vmatpush1.msra.mxu0 %v68
    %97 = vmatprep.subr.mxu0 0.0
    %98 = vmatpush1.msra.mxu0 %v69
    %99 = vmatprep.subr.mxu0 0.0
    %100 = vmatpush1.msra.mxu0 %v70
    %101 = vmatprep.subr.mxu0 0.0
    %102 = vmatpush1.msra.mxu0 %v71
    %103 = vmatprep.subr.mxu0 0.0
    %104 = vmatpush1.msra.mxu0 %v72
    %105 = vmatprep.subr.mxu0 0.0
    %106 = vmatpush1.msra.mxu0 %v73
    %107 = vmatprep.subr.mxu0 0.0
    %108 = vmatpush1.msra.mxu0 %v74
    %109 = vmatprep.subr.mxu0 0.0
    %110 = vmatpush1.msra.mxu0 %v75
    %111 = vmatprep.subr.mxu0 0.0
    %112 = vmatpush1.msra.mxu0 %v76
    %113 = vmatprep.subr.mxu0 0.0
    %114 = vmatpush1.msra.mxu0 %v77
    %115 = vmatprep.subr.mxu0 0.0
    %116 = vmatpush1.msra.mxu0 %v78
    %117 = vmatprep.subr.mxu0 0.0
    %118 = vmatpush1.msra.mxu0 %v79
    %119 = vmatprep.subr.mxu0 0.0
    %120 = vmatpush1.msra.mxu0 0.0
    %121 = vmatprep.subr.mxu0 0.0
    %122 = vmatpush1.msra.mxu0 0.0
    %123 = vmatprep.subr.mxu0 0.0
    %124 = vmatpush1.msra.mxu0 0.0
    %125 = vmatprep.subr.mxu0 0.0
    %126 = vmatpush1.msra.mxu0 0.0
    %127 = vmatprep.subr.mxu0 0.0
    %128 = vmatpush1.msra.mxu0 0.0
    %129 = vmatprep.subr.mxu0 0.0
    %130 = vmatpush1.msra.mxu0 0.0
    %131 = vmatprep.subr.mxu0 0.0
    %132 = vmatpush1.msra.mxu0 0.0
    %133 = vmatprep.subr.mxu0 0.0
    %134 = vmatpush1.msra.mxu0 0.0
    %135 = vmatprep.subr.mxu0 0.0
    %136 = vmatpush1.msra.mxu0 0.0
    %137 = vmatprep.subr.mxu0 0.0
    %138 = vmatpush1.msra.mxu0 0.0
    %139 = vmatprep.subr.mxu0 0.0
    %140 = vmatpush1.msra.mxu0 0.0
    %141 = vmatprep.subr.mxu0 0.0
    %142 = vmatpush1.msra.mxu0 0.0
    %143 = vmatprep.subr.mxu0 0.0
    %144 = vmatpush1.msra.mxu0 0.0
    %145 = vmatprep.subr.mxu0 0.0
    %146 = vmatpush1.msra.mxu0 0.0
    %147 = vmatprep.subr.mxu0 0.0
    %148 = vmatpush1.msra.mxu0 0.0
    %149 = vmatprep.subr.mxu0 0.0
    %150 = vmatpush1.msra.mxu0 0.0
    %151 = vmatprep.mubr.f32.mxu0 0.0
    %152 = vmatmul.mubr.f32.gmra.mrb[0].mxu0 %v63
    %v153 = vpop.f32.mrb[0].mxu0
    %v154 = vadd.f32 %v85, %v153
    %v155 = vpop.f32.mrb[0].mxu0
    %156 = vdwg.mxu0
    %v157 = vmul.f32 %v154, 0.5
    %v158 = vtanh.pop %v157
    %v159 = vmul.f32 %v158, 0.5
    %v160 = vadd.f32 %v159, 0.5
    %161 = vst [vmem:[#allocation8] sm:$0xff] %v160
    %v162 = vld [vmem:[#allocation7] sm:$0xff]
    %v163 = vld [vmem:[#allocation7 + $0x8] sm:$0xff]
    %v164 = vld [vmem:[#allocation7 + $0x10] sm:$0xff]
    %v165 = vld [vmem:[#allocation7 + $0x18] sm:$0xff]
    %v166 = vld [vmem:[#allocation7 + $0x20] sm:$0xff]
    %v167 = vld [vmem:[#allocation7 + $0x28] sm:$0xff]
    %v168 = vld [vmem:[#allocation7 + $0x30] sm:$0xff]
    %v169 = vld [vmem:[#allocation7 + $0x38] sm:$0xff]
    %v170 = vld [vmem:[#allocation7 + $0x40] sm:$0xff]
    %v171 = vld [vmem:[#allocation7 + $0x48] sm:$0xff]
    %v172 = vld [vmem:[#allocation7 + $0x50] sm:$0xff]
    %v173 = vld [vmem:[#allocation7 + $0x58] sm:$0xff]
    %v174 = vld [vmem:[#allocation7 + $0x60] sm:$0xff]
    %v175 = vld [vmem:[#allocation7 + $0x68] sm:$0xff]
    %v176 = vld [vmem:[#allocation7 + $0x70] sm:$0xff]
    %v177 = vld [vmem:[#allocation7 + $0x78] sm:$0xff]
    %v178 = vld [vmem:[%s4] sm:$0x1]
    %v180 = vlaneseq
    %v181 = vshrl.u32 %v180, 7
    %v182 = vsub.s32 0, %v181
    %v183 = vrot.slane %v178, %v182
    %185 = vmatprep.subr.mxu0 0.0
    %186 = vmatpush1.msra.mxu0 %v162
    %187 = vmatprep.subr.mxu0 0.0
    %188 = vmatpush1.msra.mxu0 %v163
    %189 = vmatprep.subr.mxu0 0.0
    %190 = vmatpush1.msra.mxu0 %v164
    %191 = vmatprep.subr.mxu0 0.0
    %192 = vmatpush1.msra.mxu0 %v165
    %193 = vmatprep.subr.mxu0 0.0
    %194 = vmatpush1.msra.mxu0 %v166
    %195 = vmatprep.subr.mxu0 0.0
    %196 = vmatpush1.msra.mxu0 %v167
    %197 = vmatprep.subr.mxu0 0.0
    %198 = vmatpush1.msra.mxu0 %v168
    %199 = vmatprep.subr.mxu0 0.0
    %200 = vmatpush1.msra.mxu0 %v169
    %201 = vmatprep.subr.mxu0 0.0
    %202 = vmatpush1.msra.mxu0 %v170
    %203 = vmatprep.subr.mxu0 0.0
    %204 = vmatpush1.msra.mxu0 %v171
    %205 = vmatprep.subr.mxu0 0.0
    %206 = vmatpush1.msra.mxu0 %v172
    %207 = vmatprep.subr.mxu0 0.0
    %208 = vmatpush1.msra.mxu0 %v173
    %209 = vmatprep.subr.mxu0 0.0
    %210 = vmatpush1.msra.mxu0 %v174
    %211 = vmatprep.subr.mxu0 0.0
    %212 = vmatpush1.msra.mxu0 %v175
    %213 = vmatprep.subr.mxu0 0.0
    %214 = vmatpush1.msra.mxu0 %v176
    %215 = vmatprep.subr.mxu0 0.0
    %216 = vmatpush1.msra.mxu0 %v177
    %217 = vmatprep.subr.mxu0 0.0
    %218 = vmatpush1.msra.mxu0 0.0
    %219 = vmatprep.subr.mxu0 0.0
    %220 = vmatpush1.msra.mxu0 0.0
    %221 = vmatprep.subr.mxu0 0.0
    %222 = vmatpush1.msra.mxu0 0.0
    %223 = vmatprep.subr.mxu0 0.0
    %224 = vmatpush1.msra.mxu0 0.0
    %225 = vmatprep.subr.mxu0 0.0
    %226 = vmatpush1.msra.mxu0 0.0
    %227 = vmatprep.subr.mxu0 0.0
    %228 = vmatpush1.msra.mxu0 0.0
    %229 = vmatprep.subr.mxu0 0.0
    %230 = vmatpush1.msra.mxu0 0.0
    %231 = vmatprep.subr.mxu0 0.0
    %232 = vmatpush1.msra.mxu0 0.0
    %233 = vmatprep.subr.mxu0 0.0
    %234 = vmatpush1.msra.mxu0 0.0
    %235 = vmatprep.subr.mxu0 0.0
    %236 = vmatpush1.msra.mxu0 0.0
    %237 = vmatprep.subr.mxu0 0.0
    %238 = vmatpush1.msra.mxu0 0.0
    %239 = vmatprep.subr.mxu0 0.0
    %240 = vmatpush1.msra.mxu0 0.0
    %241 = vmatprep.subr.mxu0 0.0
    %242 = vmatpush1.msra.mxu0 0.0
    %243 = vmatprep.subr.mxu0 0.0
    %244 = vmatpush1.msra.mxu0 0.0
    %245 = vmatprep.subr.mxu0 0.0
    %246 = vmatpush1.msra.mxu0 0.0
    %247 = vmatprep.subr.mxu0 0.0
    %248 = vmatpush1.msra.mxu0 0.0
    %249 = vmatprep.mubr.f32.mxu0 0.0
    %250 = vmatmul.mubr.f32.gmra.mrb[0].mxu0 %v160
    %v251 = vpop.f32.mrb[0].mxu0
    %v252 = vadd.f32 %v183, %v251
    %v253 = vpop.f32.mrb[0].mxu0
    %254 = vdwg.mxu0
    %v255 = vmul.f32 %v252, 0.5
    %v256 = vtanh.pop %v255
    %v257 = vmul.f32 %v256, 0.5
    %v258 = vadd.f32 %v257, 0.5
    %259 = vst [vmem:[#allocation9] sm:$0xff] %v258
    // Predicated region
    $region34: #{tpu_custom_call.1} parent=1 // pred_check
      _
    $region35: #{tpu_custom_call.1} parent=1 // pred_check_branch
      %261 = sbr.rel (0) target = $region37
    $region36: #{tpu_custom_call.1} parent=1 // pred_region
      %s263 = ssub.s32 128, 128
      %264 = vsyncadd [#allocation4], %s263
      %s266 = sshll.u32 [#allocation8], 4
      %s267 = int_to_ptr.vmem [resolvable:$true] %s266
      %269 = dma.vmem_to_hbm [thread:$0]  %s267, 128, %s5, [#allocation4]
    $region37: #{tpu_custom_call.1} parent=1 // pred_fallthru
      _
    // Predicated region
    $region38: #{tpu_custom_call.1} parent=1 // pred_check
      _
    $region39: #{tpu_custom_call.1} parent=1 // pred_check_branch
      %271 = sbr.rel (0) target = $region41
    $region40: #{tpu_custom_call.1} parent=1 // pred_region
      %s273 = ssub.s32 128, 128
      %274 = vsyncadd [#allocation10], %s273
      %s276 = sshll.u32 [#allocation9], 4
      %s277 = int_to_ptr.vmem [resolvable:$true] %s276
      %279 = dma.vmem_to_hbm [thread:$0]  %s277, 128, %s6, [#allocation10]
    $region41: #{tpu_custom_call.1} parent=1 // pred_fallthru
      _
    // Predicated region
    $region42: #{tpu_custom_call.1} parent=1 // pred_check
      _
    $region43: #{tpu_custom_call.1} parent=1 // pred_check_branch
      %281 = sbr.rel (0) target = $region45
    $region44: #{tpu_custom_call.1} parent=1 // pred_region
      %282 = dma.done [#allocation4], 128
    $region45: #{tpu_custom_call.1} parent=1 // pred_fallthru
      _
    // Predicated region
    $region46: #{tpu_custom_call.1} parent=1 // pred_check
      _
    $region47: #{tpu_custom_call.1} parent=1 // pred_check_branch
      %284 = sbr.rel (0) target = $region49
    $region48: #{tpu_custom_call.1} parent=1 // pred_region
      %285 = dma.done [#allocation10], 128
    $region49: #{tpu_custom_call.1} parent=1 // pred_fallthru
      _
    %286 = vsyncpa [#allocation3], 1
    %287 = vsyncpa [#allocation6], 1
    %288 = vsyncpa [#allocation4], 1
    %289 = vsyncpa [#allocation10], 1

</llo_original>
